<compile_context>
chip_gen: v7x
topology: tpu7x:2x2x1
jax: 0.10.0
libtpu: 0.0.40
codegen_flags: <defaults>
</compile_context>

<pallas_src>
import jax
import jax.numpy as jnp
from jax.experimental import pallas as pl
from jax.experimental.pallas import tpu as pltpu


# ---------------------------------------------------------------------------
# Kernels
# ---------------------------------------------------------------------------

def e1_highway_prod_kernel(emb_ref, lit_ref, rel_ref, wet_ref, wlt_ref, b_ref,
                           o_ref):
    """prod = HighwayTF([e1_emb, e1_lit]) * rel_emb   (tiny (B, D) problem, f32)."""
    emb = emb_ref[...]
    logits = (
        jnp.dot(emb, wet_ref[...], preferred_element_type=jnp.float32)
        + jnp.dot(lit_ref[...], wlt_ref[...], preferred_element_type=jnp.float32)
        + b_ref[...]
    )
    m = jnp.max(logits, axis=-1, keepdims=True)
    e = jnp.exp(logits - m)
    g = e / jnp.sum(e, axis=-1, keepdims=True)        # exact softmax
    e1_h = g + (1.0 - g) * emb
    o_ref[...] = (e1_h * rel_ref[...]).astype(o_ref.dtype)


def entity_highway_kernel(embT_ref, litT_ref, we_ref, wl_ref, b_ref, o_ref):
    """One entity tile of e2_hT = HighwayTF(entities).T, feature-major, bf16 out.

    embT_ref: (D, TE) bf16   litT_ref: (L, TE) bf16
    we_ref  : (D, D)  bf16   wl_ref  : (D, L)  bf16   b_ref: (D, 1) f32
    o_ref   : (D, TE) bf16
    """
    embT = embT_ref[...]
    logits = (
        jnp.dot(we_ref[...], embT, preferred_element_type=jnp.float32)
        + jnp.dot(wl_ref[...], litT_ref[...], preferred_element_type=jnp.float32)
        + b_ref[...]
    )                                                   # (D, TE) f32
    m = jnp.max(logits, axis=0, keepdims=True)
    e = jnp.exp(logits - m)
    g = e / jnp.sum(e, axis=0, keepdims=True)           # exact softmax
    e2_hT = g + (1.0 - g) * embT.astype(jnp.float32)
    o_ref[...] = e2_hT.astype(o_ref.dtype)


def cached_score_kernel(prod_ref, e2hT_ref, o_ref):
    """Per entity tile: sigmoid(prod @ e2_hT_tile) using the cached bf16 e2_hT."""
    prod = prod_ref[...].astype(jnp.bfloat16)
    s = jnp.dot(prod, e2hT_ref[...], preferred_element_type=jnp.float32)
    o_ref[...] = pl.reciprocal(1.0 + jnp.exp(-s), approx=True).astype(o_ref.dtype)


def fused_score_kernel(prod_ref, embT_ref, litT_ref, we_ref, wl_ref, b_ref,
                       o_ref):
    """Fallback: recompute HighwayTF on the entity tile, then score (one pass)."""
    embT = embT_ref[...]
    logits = (
        jnp.dot(we_ref[...], embT, preferred_element_type=jnp.float32)
        + jnp.dot(wl_ref[...], litT_ref[...], preferred_element_type=jnp.float32)
        + b_ref[...]
    )
    m = jnp.max(logits, axis=0, keepdims=True)
    e = jnp.exp(logits - m)
    g = e / jnp.sum(e, axis=0, keepdims=True)
    e2_hT = (g + (1.0 - g) * embT.astype(jnp.float32)).astype(jnp.bfloat16)
    prod = prod_ref[...].astype(jnp.bfloat16)
    s = jnp.dot(prod, e2_hT, preferred_element_type=jnp.float32)
    o_ref[...] = pl.reciprocal(1.0 + jnp.exp(-s), approx=True).astype(o_ref.dtype)


# ---------------------------------------------------------------------------
# VMEM planning / tiling helpers
# ---------------------------------------------------------------------------

def _round_up(x, m):
    return ((x + m - 1) // m) * m


def _vmem_plan():
    """(working-set budget for tile sizing, vmem_limit_bytes for compiler)."""
    try:
        phys = int(pltpu.get_tpu_info().vmem_capacity_bytes)
    except Exception:
        phys = 64 << 20            # conservative: v7x per-TC VMEM
    budget = min(phys // 2, 48 << 20)
    limit = max(min(phys - (8 << 20), 100 << 20), budget + (8 << 20))
    return int(budget), int(limit)


def _choose_block_e(num_entities, d, l, budget_bytes):
    # Per-entity-column bytes of the heaviest kernel (highway on a tile):
    #   double-buffered bf16 streamed inputs (D+L rows)
    # + double-buffered output tile (assume up to 256 f32 sublanes)
    # + ~4 f32 (D, TE) temporaries (logits / exp / gate / blended e2_hT)
    per_col = 2 * (d + l) * 2 + 2 * 256 * 4 + 4 * d * 4
    be = budget_bytes // max(per_col, 1)
    be = (be // 128) * 128
    be = max(128, min(be, 4096, _round_up(num_entities, 128)))
    return int(be)


def _cparams(vmem_limit):
    return pltpu.CompilerParams(
        dimension_semantics=("parallel",),
        vmem_limit_bytes=int(vmem_limit),
    )


def _vmem_spec():
    return pl.BlockSpec(memory_space=pltpu.MemorySpace.VMEM)


# ---------------------------------------------------------------------------
# pallas_call wrappers
# ---------------------------------------------------------------------------

def e1_highway_prod(e1_emb, e1_lit, rel_emb, w_e_t, w_l_t, b_row):
    b, d = e1_emb.shape
    return pl.pallas_call(
        e1_highway_prod_kernel,
        out_shape=jax.ShapeDtypeStruct((b, d), jnp.float32),
        in_specs=[_vmem_spec() for _ in range(6)],
        out_specs=_vmem_spec(),
    )(e1_emb, e1_lit, rel_emb, w_e_t, w_l_t, b_row)


def compute_e2_hT(emb_t, lit_t, w_e, w_l, b_col, block_e, vmem_limit):
    d, e_pad = emb_t.shape
    l = lit_t.shape[0]
    grid = (e_pad // block_e,)
    return pl.pallas_call(
        entity_highway_kernel,
        out_shape=jax.ShapeDtypeStruct((d, e_pad), jnp.bfloat16),
        grid=grid,
        in_specs=[
            pl.BlockSpec((d, block_e), lambda i: (0, i)),   # entity emb tile
            pl.BlockSpec((l, block_e), lambda i: (0, i)),   # literal tile
            pl.BlockSpec((d, d), lambda i: (0, 0)),         # W_emb (resident)
            pl.BlockSpec((d, l), lambda i: (0, 0)),         # W_lit (resident)
            pl.BlockSpec((d, 1), lambda i: (0, 0)),         # bias  (resident)
        ],
        out_specs=pl.BlockSpec((d, block_e), lambda i: (0, i)),
        compiler_params=_cparams(vmem_limit),
    )(emb_t, lit_t, w_e, w_l, b_col)


def cached_entity_score(prod, e2_hT, block_e, vmem_limit):
    b, d = prod.shape
    e_pad = e2_hT.shape[1]
    grid = (e_pad // block_e,)
    return pl.pallas_call(
        cached_score_kernel,
        out_shape=jax.ShapeDtypeStruct((b, e_pad), jnp.float32),
        grid=grid,
        in_specs=[
            pl.BlockSpec((b, d), lambda i: (0, 0)),          # prod (resident)
            pl.BlockSpec((d, block_e), lambda i: (0, i)),    # cached e2_hT tile
        ],
        out_specs=pl.BlockSpec((b, block_e), lambda i: (0, i)),
        compiler_params=_cparams(vmem_limit),
    )(prod, e2_hT)


def fused_entity_score(prod, emb_t, lit_t, w_e, w_l, b_col, block_e, vmem_limit):
    b, d = prod.shape
    l, e_pad = lit_t.shape
    grid = (e_pad // block_e,)
    return pl.pallas_call(
        fused_score_kernel,
        out_shape=jax.ShapeDtypeStruct((b, e_pad), jnp.float32),
        grid=grid,
        in_specs=[
            pl.BlockSpec((b, d), lambda i: (0, 0)),          # prod (resident)
            pl.BlockSpec((d, block_e), lambda i: (0, i)),    # entity emb tile
            pl.BlockSpec((l, block_e), lambda i: (0, i)),    # literal tile
            pl.BlockSpec((d, d), lambda i: (0, 0)),          # W_emb (resident)
            pl.BlockSpec((d, l), lambda i: (0, 0)),          # W_lit (resident)
            pl.BlockSpec((d, 1), lambda i: (0, 0)),          # bias  (resident)
        ],
        out_specs=pl.BlockSpec((b, block_e), lambda i: (0, i)),
        compiler_params=_cparams(vmem_limit),
    )(prod, emb_t, lit_t, w_e, w_l, b_col)


# ---------------------------------------------------------------------------
# Parameter prep + forward
# ---------------------------------------------------------------------------

def prepare_params(emb_e, emb_rel, num_lit, gate_w, gate_b,
                   block_e=None, cache_e2=True):
    emb_e = jnp.asarray(emb_e, jnp.float32)
    emb_rel = jnp.asarray(emb_rel, jnp.float32)
    num_lit = jnp.asarray(num_lit, jnp.float32)
    gate_w = jnp.asarray(gate_w, jnp.float32)
    gate_b = jnp.asarray(gate_b, jnp.float32)

    num_entities, d = emb_e.shape
    l = num_lit.shape[1]

    budget, vmem_limit = _vmem_plan()
    if block_e is None:
        block_e = _choose_block_e(num_entities, d, l, budget)
    assert block_e % 128 == 0, "block_e must be a multiple of 128"

    # Pad the entity axis once (zeros) so every tile is full-sized / lane-dense.
    e_pad = _round_up(num_entities, block_e)
    emb_pad = jnp.pad(emb_e, ((0, e_pad - num_entities), (0, 0)))
    lit_pad = jnp.pad(num_lit, ((0, e_pad - num_entities), (0, 0)))

    w_e = gate_w[:, :d]                    # (D, D)
    w_l = gate_w[:, d:]                    # (D, L)

    params = {
        # originals (f32) for the e1 gathers and the reference
        "emb_e": emb_e, "emb_rel": emb_rel, "num_lit": num_lit,
        "gate_w": gate_w, "gate_b": gate_b,
        "num_entities": num_entities, "e_pad": e_pad,
        "block_e": int(block_e), "vmem_limit": int(vmem_limit),
        # bf16 feature-major streamed tables (halve the HBM stream)
        "emb_e_t": jnp.transpose(emb_pad).astype(jnp.bfloat16),    # (D, E_pad)
        "num_lit_t": jnp.transpose(lit_pad).astype(jnp.bfloat16),  # (L, E_pad)
        # gate params for the entity-side (feature-major) kernels, bf16
        "w_e": w_e.astype(jnp.bfloat16),
        "w_l": w_l.astype(jnp.bfloat16),
        "b_col": gate_b.reshape(d, 1),
        # gate params for the tiny e1-side kernel, f32
        "w_e_t": jnp.transpose(w_e),
        "w_l_t": jnp.transpose(w_l),
        "b_row": gate_b.reshape(1, d),
    }

    if cache_e2:
        # Parameters are frozen at inference; e2_h = HighwayTF(entities) is
        # query-independent, so compute it once (bf16, feature-major).
        params["e2_hT"] = compute_e2_hT(
            params["emb_e_t"], params["num_lit_t"], params["w_e"],
            params["w_l"], params["b_col"], int(block_e), int(vmem_limit))
    else:
        params["e2_hT"] = None
    return params


def distmult_literal_htf_forward(e1, rel, params):
    """Full forward pass (eval mode; Dropout is identity at inference)."""
    e1_idx = e1.reshape(-1)
    rel_idx = rel.reshape(-1)
    b = e1_idx.shape[0]
    b_pad = _round_up(b, 8)                 # sublane-aligned batch

    e1_emb = params["emb_e"][e1_idx]        # (B, D) gather (plain-JAX glue)
    e1_lit = params["num_lit"][e1_idx]      # (B, L)
    rel_emb = params["emb_rel"][rel_idx]    # (B, D)
    if b_pad != b:
        pad = ((0, b_pad - b), (0, 0))
        e1_emb = jnp.pad(e1_emb, pad)
        e1_lit = jnp.pad(e1_lit, pad)
        rel_emb = jnp.pad(rel_emb, pad)

    prod = e1_highway_prod(e1_emb, e1_lit, rel_emb,
                           params["w_e_t"], params["w_l_t"], params["b_row"])

    if params["e2_hT"] is not None:
        pred = cached_entity_score(prod, params["e2_hT"],
                                   params["block_e"], params["vmem_limit"])
    else:
        pred = fused_entity_score(prod, params["emb_e_t"], params["num_lit_t"],
                                  params["w_e"], params["w_l"], params["b_col"],
                                  params["block_e"], params["vmem_limit"])
    return pred[:b, :params["num_entities"]]


# ---------------------------------------------------------------------------
# Pure-JAX reference for correctness checking
# ---------------------------------------------------------------------------

def reference_forward(e1, rel, params):
    emb_e, emb_rel = params["emb_e"], params["emb_rel"]
    num_lit, w, b = params["num_lit"], params["gate_w"], params["gate_b"]
    d = w.shape[0]

    def highway_ref(x):
        g = jax.nn.softmax(x @ w.T + b, axis=1)
        return g + (1.0 - g) * x[:, :d]

    e1_idx, rel_idx = e1.reshape(-1), rel.reshape(-1)
    e1_h = highway_ref(jnp.concatenate([emb_e[e1_idx], num_lit[e1_idx]], axis=1))
    rel_emb = emb_rel[rel_idx]
    e2_h = highway_ref(jnp.concatenate([emb_e, num_lit], axis=1))
    return jax.nn.sigmoid((e1_h * rel_emb) @ e2_h.T)


if __name__ == "__main__":
    # Small deterministic config; num_entities deliberately NOT a multiple of
    # 128 to exercise the entity-axis padding, block_e=256 -> 4 entity tiles.
    num_entities = 1000
    num_relations = 16
    emb_dim = 32          # Config.embedding_dim
    n_num_lit = 16
    batch = 8
    block_e = 256

    key = jax.random.PRNGKey(0)
    k1, k2, k3, k4, k5, k6, k7 = jax.random.split(key, 7)

    # xavier_normal-ish deterministic init; padding_idx=0 rows zeroed
    std_e = (2.0 / (num_entities + emb_dim)) ** 0.5
    std_r = (2.0 / (num_relations + emb_dim)) ** 0.5
    emb_e = jax.random.normal(k1, (num_entities, emb_dim), jnp.float32) * std_e
    emb_e = emb_e.at[0].set(0.0)
    emb_rel = jax.random.normal(k2, (num_relations, emb_dim), jnp.float32) * std_r
    emb_rel = emb_rel.at[0].set(0.0)

    num_lit = jax.random.uniform(k3, (num_entities, n_num_lit), jnp.float32)

    in_feat = emb_dim + n_num_lit
    bound = (1.0 / in_feat) ** 0.5   # nn.Linear default init range
    gate_w = jax.random.uniform(k4, (emb_dim, in_feat), jnp.float32, -bound, bound)
    gate_b = jax.random.uniform(k5, (emb_dim,), jnp.float32, -bound, bound)

    e1 = jax.random.randint(k6, (batch, 1), 0, num_entities, jnp.int32)
    rel = jax.random.randint(k7, (batch, 1), 0, num_relations, jnp.int32)

    ref = jax.block_until_ready(reference_forward(e1, rel,
                                                  {"emb_e": emb_e,
                                                   "emb_rel": emb_rel,
                                                   "num_lit": num_lit,
                                                   "gate_w": gate_w,
                                                   "gate_b": gate_b}))

    # Main path: cached e2_hT (parameters frozen at inference).
    params = prepare_params(emb_e, emb_rel, num_lit, gate_w, gate_b,
                            block_e=block_e, cache_e2=True)
    pred = jax.block_until_ready(distmult_literal_htf_forward(e1, rel, params))
    assert pred.shape == (batch, num_entities)
    # bf16 table storage + approx sigmoid reciprocal -> loosened tolerance
    assert jnp.allclose(pred, ref, atol=3e-3, rtol=3e-3), "cached path mismatch"

    # Fallback path: fully fused highway+score per call (no cached e2_hT).
    params_nc = prepare_params(emb_e, emb_rel, num_lit, gate_w, gate_b,
                               block_e=block_e, cache_e2=False)
    pred2 = jax.block_until_ready(distmult_literal_htf_forward(e1, rel, params_nc))
    assert pred2.shape == (batch, num_entities)
    assert jnp.allclose(pred2, ref, atol=3e-3, rtol=3e-3), "fused path mismatch"

    print("KERNEL_OK")
</pallas_src>

<mosaic_0001>
module attributes {stable_mosaic.version = 11 : i64} {
  func.func @entity_highway_kernel(%arg0: i32, %arg1: memref<32x256xbf16, #tpu.memory_space<vmem>>, %arg2: memref<16x256xbf16, #tpu.memory_space<vmem>>, %arg3: memref<32x32xbf16, #tpu.memory_space<vmem>>, %arg4: memref<32x16xbf16, #tpu.memory_space<vmem>>, %arg5: memref<32x1xf32, #tpu.memory_space<vmem>>, %arg6: memref<32x256xbf16, #tpu.memory_space<vmem>>) attributes {dimension_semantics = [#tpu.dimension_semantics<parallel>], iteration_bounds = array<i64: 4>, scalar_prefetch = 0 : i64, scratch_operands = 0 : i64, tpu.core_type = #tpu.core_type<tc>, window_params = [{transform_indices = @transform_0, window_bounds = array<i64: 32, 256>}, {transform_indices = @transform_1, window_bounds = array<i64: 16, 256>}, {pipeline_mode = #tpu.pipeline_mode<synchronous>, transform_indices = @transform_2, window_bounds = array<i64: 32, 32>}, {pipeline_mode = #tpu.pipeline_mode<synchronous>, transform_indices = @transform_3, window_bounds = array<i64: 32, 16>}, {pipeline_mode = #tpu.pipeline_mode<synchronous>, transform_indices = @transform_4, window_bounds = array<i64: 32, 1>}, {transform_indices = @transform_5, window_bounds = array<i64: 32, 256>}]} {
    %c0 = arith.constant 0 : index
    %c0_0 = arith.constant 0 : index
    %0 = vector.load %arg1[%c0, %c0_0] : memref<32x256xbf16, #tpu.memory_space<vmem>>, vector<32x256xbf16>
    %c0_1 = arith.constant 0 : index
    %c0_2 = arith.constant 0 : index
    %1 = vector.load %arg3[%c0_1, %c0_2] : memref<32x32xbf16, #tpu.memory_space<vmem>>, vector<32x32xbf16>
    %cst = arith.constant dense<0.000000e+00> : vector<32x256xf32>
    %2 = tpu.matmul %1, %0, %cst {dimension_numbers = #tpu.dot_dimension_numbers<[1], [0], [0], [1], [0, 0, 1, 1], [], []>} : vector<32x32xbf16>, vector<32x256xbf16>, vector<32x256xf32> -> vector<32x256xf32>
    %c0_3 = arith.constant 0 : index
    %c0_4 = arith.constant 0 : index
    %3 = vector.load %arg4[%c0_3, %c0_4] : memref<32x16xbf16, #tpu.memory_space<vmem>>, vector<32x16xbf16>
    %c0_5 = arith.constant 0 : index
    %c0_6 = arith.constant 0 : index
    %4 = vector.load %arg2[%c0_5, %c0_6] : memref<16x256xbf16, #tpu.memory_space<vmem>>, vector<16x256xbf16>
    %cst_7 = arith.constant dense<0.000000e+00> : vector<32x256xf32>
    %5 = tpu.matmul %3, %4, %cst_7 {dimension_numbers = #tpu.dot_dimension_numbers<[1], [0], [0], [1], [0, 0, 1, 1], [], []>} : vector<32x16xbf16>, vector<16x256xbf16>, vector<32x256xf32> -> vector<32x256xf32>
    %6 = arith.addf %2, %5 : vector<32x256xf32>
    %c0_8 = arith.constant 0 : index
    %c0_9 = arith.constant 0 : index
    %7 = vector.load %arg5[%c0_8, %c0_9] : memref<32x1xf32, #tpu.memory_space<vmem>>, vector<32x1xf32>
    %8 = vector.broadcast %7 : vector<32x1xf32> to vector<32x256xf32>
    %9 = arith.addf %6, %8 : vector<32x256xf32>
    %cst_10 = arith.constant dense<0xFF800000> : vector<256xf32>
    %10 = vector.multi_reduction <maximumf>, %9, %cst_10 [0] : vector<32x256xf32> to vector<256xf32>
    %11 = vector.shape_cast %10 : vector<256xf32> to vector<1x256xf32>
    %12 = vector.broadcast %11 : vector<1x256xf32> to vector<32x256xf32>
    %13 = arith.subf %9, %12 : vector<32x256xf32>
    %14 = math.exp %13 : vector<32x256xf32>
    %cst_11 = arith.constant dense<0.000000e+00> : vector<256xf32>
    %15 = vector.multi_reduction <add>, %14, %cst_11 [0] : vector<32x256xf32> to vector<256xf32>
    %16 = vector.shape_cast %15 : vector<256xf32> to vector<1x256xf32>
    %17 = vector.broadcast %16 : vector<1x256xf32> to vector<32x256xf32>
    %18 = arith.divf %14, %17 : vector<32x256xf32>
    %cst_12 = arith.constant 1.000000e+00 : f32
    %19 = vector.broadcast %cst_12 : f32 to vector<32x256xf32>
    %20 = arith.subf %19, %18 : vector<32x256xf32>
    %21 = arith.extf %0 : vector<32x256xbf16> to vector<32x256xf32>
    %22 = arith.mulf %20, %21 : vector<32x256xf32>
    %23 = arith.addf %18, %22 : vector<32x256xf32>
    %24 = arith.truncf %23 : vector<32x256xf32> to vector<32x256xbf16>
    %c0_13 = arith.constant 0 : index
    %c0_14 = arith.constant 0 : index
    %25 = vector.load %arg6[%c0_13, %c0_14] : memref<32x256xbf16, #tpu.memory_space<vmem>>, vector<32x256xbf16>
    tpu.vector_store %arg6[%c0_13, %c0_14], %24 {strides = array<i32>} : memref<32x256xbf16, #tpu.memory_space<vmem>>, vector<32x256xbf16>,
    return
  }
  func.func @transform_0(%arg0: i32) -> (i32, i32) {
    %c0_i32 = arith.constant 0 : i32
    %c0_i32_0 = arith.constant 0 : i32
    return %c0_i32, %arg0 : i32, i32
  }
  func.func @transform_1(%arg0: i32) -> (i32, i32) {
    %c0_i32 = arith.constant 0 : i32
    %c0_i32_0 = arith.constant 0 : i32
    return %c0_i32, %arg0 : i32, i32
  }
  func.func @transform_2(%arg0: i32) -> (i32, i32) {
    %c0_i32 = arith.constant 0 : i32
    %c0_i32_0 = arith.constant 0 : i32
    %c0_i32_1 = arith.constant 0 : i32
    return %c0_i32, %c0_i32_0 : i32, i32
  }
  func.func @transform_3(%arg0: i32) -> (i32, i32) {
    %c0_i32 = arith.constant 0 : i32
    %c0_i32_0 = arith.constant 0 : i32
    %c0_i32_1 = arith.constant 0 : i32
    return %c0_i32, %c0_i32_0 : i32, i32
  }
  func.func @transform_4(%arg0: i32) -> (i32, i32) {
    %c0_i32 = arith.constant 0 : i32
    %c0_i32_0 = arith.constant 0 : i32
    %c0_i32_1 = arith.constant 0 : i32
    return %c0_i32, %c0_i32_0 : i32, i32
  }
  func.func @transform_5(%arg0: i32) -> (i32, i32) {
    %c0_i32 = arith.constant 0 : i32
    %c0_i32_0 = arith.constant 0 : i32
    return %c0_i32, %arg0 : i32, i32
  }
}

</mosaic_0001>

<llo_original>
// kernel: tpu_custom_call.1
$region0: #{tpu_custom_call.1}
  #allocation0 [shape = 'u32[]', space=smem, size = 0x4, offset = 0x4, fixed_abs, tag = 'smem constant byte address 0x4 - core index']
  #allocation1 [shape = 'u32[144,128]{1,0:T(1,128)}', space=vmem, size = 0x12000, scoped, tag = 'internal scratch']
  %s0 = inlined_call_operand.hbm [shape: bf16[32,1024], index: 0, kind: input, shape index: {}]
  %s1 = inlined_call_operand.hbm [shape: bf16[16,1024], index: 1, kind: input, shape index: {}]
  %s2 = inlined_call_operand.vmem [shape: bf16[32,32], index: 2, kind: input, shape index: {}]
  %s3 = inlined_call_operand.vmem [shape: bf16[32,16], index: 3, kind: input, shape index: {}]
  %s4 = inlined_call_operand.vmem [shape: f32[32,1], index: 4, kind: input, shape index: {}]
  %s5 = inlined_call_operand.hbm [shape: bf16[32,1024], index: 5, kind: output, shape index: {}]
  %s6 = sld [smem:[#allocation0]]
  $region61: #{tpu_custom_call.1} parent=0
    _
  %s8 = ssub.s32 1, %s6
  %s9 = scalar_select 0, %s8, %s6
  $region1: #{tpu_custom_call.1} parent=0
    #allocation2 [shape = 'u8[32768]{0}', space=vmem, size = 0x8000, scoped, tag = 'input window, operand 0']
    #allocation3 [shape = 's32[2]{0}', space=sflag, size = 0x8, scoped, tag = 'scoped memory for tpu_custom_call.1']
    #allocation4 [shape = 's32[2]{0}', space=sflag, size = 0x8, scoped, tag = 'scoped memory for tpu_custom_call.1']
    #allocation5 [shape = 'u8[16384]{0}', space=vmem, size = 0x4000, scoped, tag = 'input window, operand 1']
    #allocation6 [shape = 's32[2]{0}', space=sflag, size = 0x8, scoped, tag = 'scoped memory for tpu_custom_call.1']
    #allocation7 [shape = 'u8[32768]{0}', space=vmem, size = 0x8000, scoped, tag = 'output window, operand 0']
    %10 = vsyncpa [#allocation3], 0
    %s11 = scalar_lea.sflag [#allocation3], 1
    %12 = vsyncpa %s11, 0
    %13 = vsyncpa [#allocation6], 0
    %s14 = scalar_lea.sflag [#allocation6], 1
    %15 = vsyncpa %s14, 0
    %16 = vsyncpa [#allocation4], 0
    %s17 = scalar_lea.sflag [#allocation4], 1
    %18 = vsyncpa %s17, 0
    loop: start=0, step=1, limit=6
    $region2: #{tpu_custom_call.1} parent=1 // loop_pre_header
      _
    $region3: #{tpu_custom_call.1} parent=1 // loop_header
      %s20 = sphi 0, %s24
      %p21 = scmp.ge.s32.totalorder %s20, 6
      %s30 = sphi 0, %s32
      %s33 = sphi 0, %s30
      %s34 = sphi 0, %s33
      %s50 = sphi 0, %s34
      %s56 = sphi 0, %s58
      %s59 = sphi 0, %s56
      %s60 = sphi 0, %s59
      %s76 = sphi 0, %s60
      %s80 = sphi 0, %s80
      %s82 = sphi 0, %s80
      %s83 = sphi 0, %s82
      %s97 = sphi 0, %s83
      %s101 = sphi 0, %s101
      %s103 = sphi 0, %s101
      %s104 = sphi 0, %s103
      %s118 = sphi 0, %s104
      %s122 = sphi 0, %s122
      %s124 = sphi 0, %s122
      %s125 = sphi 0, %s124
      %s139 = sphi 0, %s125
      %s145 = sphi 0, %s147
      %s148 = sphi 0, %s145
      %s149 = sphi 0, %s148
      %s165 = sphi 0, %s149
    $region4: #{tpu_custom_call.1} parent=1 // loop_header_branch
      %23 = sbr.rel (%p21) target = $region8
    $region5: #{tpu_custom_call.1} parent=1 // loop_body
      %s25 = ssub.s32 %s20, 1
      %s26 = ssub.s32 %s20, 2
      %s27 = sadd.s32 %s20, 1
      %s28 = ssub.s32 %s20, %s27
      %p29 = scmp.eq.s32.totalorder %s28, 0
      %s31 = sadd.s32 %s30, 1
      %s32 = scalar_select %p29, %s30, %s31
      %p35 = pneg %p29
      %p36 = scmp.eq.s32.totalorder %s20, 3
      %p37 = por %p35, %p36
      %p38 = scmp.ne.s32.totalorder %s30, %s33
      %p39 = scmp.eq.s32.totalorder %s20, 0
      %p40 = por %p38, %p39
      %p41 = scmp.ne.s32.totalorder %s30, %s33
      %p42 = scmp.eq.s32.totalorder %s25, 3
      %p43 = por %p41, %p42
      %p44 = scmp.ne.s32.totalorder %s33, %s34
      %p45 = scmp.eq.s32.totalorder %s25, 0
      %p46 = por %p44, %p45
      %p47 = scmp.ne.s32.totalorder %s33, %s34
      %p48 = scmp.eq.s32.totalorder %s26, 3
      %p49 = por %p47, %p48
      %p51 = scmp.ne.s32.totalorder %s34, %s50
      %p52 = scmp.eq.s32.totalorder %s26, 0
      %p53 = por %p51, %p52
      %s54 = ssub.s32 %s20, %s27
      %p55 = scmp.eq.s32.totalorder %s54, 0
      %s57 = sadd.s32 %s56, 1
      %s58 = scalar_select %p55, %s56, %s57
      %p61 = pneg %p55
      %p62 = scmp.eq.s32.totalorder %s20, 3
      %p63 = por %p61, %p62
      %p64 = scmp.ne.s32.totalorder %s56, %s59
      %p65 = scmp.eq.s32.totalorder %s20, 0
      %p66 = por %p64, %p65
      %p67 = scmp.ne.s32.totalorder %s56, %s59
      %p68 = scmp.eq.s32.totalorder %s25, 3
      %p69 = por %p67, %p68
      %p70 = scmp.ne.s32.totalorder %s59, %s60
      %p71 = scmp.eq.s32.totalorder %s25, 0
      %p72 = por %p70, %p71
      %p73 = scmp.ne.s32.totalorder %s59, %s60
      %p74 = scmp.eq.s32.totalorder %s26, 3
      %p75 = por %p73, %p74
      %p77 = scmp.ne.s32.totalorder %s60, %s76
      %p78 = scmp.eq.s32.totalorder %s26, 0
      %p79 = por %p77, %p78
      %s81 = sadd.s32 %s80, 1
      %p84 = scmp.eq.s32.totalorder %s20, 3
      %p85 = scmp.ne.s32.totalorder %s80, %s82
      %p86 = scmp.eq.s32.totalorder %s20, 0
      %p87 = por %p85, %p86
      %p88 = scmp.ne.s32.totalorder %s80, %s82
      %p89 = scmp.eq.s32.totalorder %s25, 3
      %p90 = por %p88, %p89
      %p91 = scmp.ne.s32.totalorder %s82, %s83
      %p92 = scmp.eq.s32.totalorder %s25, 0
      %p93 = por %p91, %p92
      %p94 = scmp.ne.s32.totalorder %s82, %s83
      %p95 = scmp.eq.s32.totalorder %s26, 3
      %p96 = por %p94, %p95
      %p98 = scmp.ne.s32.totalorder %s83, %s97
      %p99 = scmp.eq.s32.totalorder %s26, 0
      %p100 = por %p98, %p99
      %s102 = sadd.s32 %s101, 1
      %p105 = scmp.eq.s32.totalorder %s20, 3
      %p106 = scmp.ne.s32.totalorder %s101, %s103
      %p107 = scmp.eq.s32.totalorder %s20, 0
      %p108 = por %p106, %p107
      %p109 = scmp.ne.s32.totalorder %s101, %s103
      %p110 = scmp.eq.s32.totalorder %s25, 3
      %p111 = por %p109, %p110
      %p112 = scmp.ne.s32.totalorder %s103, %s104
      %p113 = scmp.eq.s32.totalorder %s25, 0
      %p114 = por %p112, %p113
      %p115 = scmp.ne.s32.totalorder %s103, %s104
      %p116 = scmp.eq.s32.totalorder %s26, 3
      %p117 = por %p115, %p116
      %p119 = scmp.ne.s32.totalorder %s104, %s118
      %p120 = scmp.eq.s32.totalorder %s26, 0
      %p121 = por %p119, %p120
      %s123 = sadd.s32 %s122, 1
      %p126 = scmp.eq.s32.totalorder %s20, 3
      %p127 = scmp.ne.s32.totalorder %s122, %s124
      %p128 = scmp.eq.s32.totalorder %s20, 0
      %p129 = por %p127, %p128
      %p130 = scmp.ne.s32.totalorder %s122, %s124
      %p131 = scmp.eq.s32.totalorder %s25, 3
      %p132 = por %p130, %p131
      %p133 = scmp.ne.s32.totalorder %s124, %s125
      %p134 = scmp.eq.s32.totalorder %s25, 0
      %p135 = por %p133, %p134
      %p136 = scmp.ne.s32.totalorder %s124, %s125
      %p137 = scmp.eq.s32.totalorder %s26, 3
      %p138 = por %p136, %p137
      %p140 = scmp.ne.s32.totalorder %s125, %s139
      %p141 = scmp.eq.s32.totalorder %s26, 0
      %p142 = por %p140, %p141
      %s143 = ssub.s32 %s20, %s27
      %p144 = scmp.eq.s32.totalorder %s143, 0
      %s146 = sadd.s32 %s145, 1
      %s147 = scalar_select %p144, %s145, %s146
      %p150 = pneg %p144
      %p151 = scmp.eq.s32.totalorder %s20, 3
      %p152 = por %p150, %p151
      %p153 = scmp.ne.s32.totalorder %s145, %s148
      %p154 = scmp.eq.s32.totalorder %s20, 0
      %p155 = por %p153, %p154
      %p156 = scmp.ne.s32.totalorder %s145, %s148
      %p157 = scmp.eq.s32.totalorder %s25, 3
      %p158 = por %p156, %p157
      %p159 = scmp.ne.s32.totalorder %s148, %s149
      %p160 = scmp.eq.s32.totalorder %s25, 0
      %p161 = por %p159, %p160
      %p162 = scmp.ne.s32.totalorder %s148, %s149
      %p163 = scmp.eq.s32.totalorder %s26, 3
      %p164 = por %p162, %p163
      %p166 = scmp.ne.s32.totalorder %s149, %s165
      %p167 = scmp.eq.s32.totalorder %s26, 0
      %p168 = por %p166, %p167
      %p169 = scmp.le.s32.totalorder 1, %s20
      %p170 = scmp.lt.s32.totalorder %s20, 5
      %p171 = pnand %p169, %p170
      %p172 = pneg %p171
      // Predicated region
      $region9: #{tpu_custom_call.1} parent=5 // pred_check
        _
      $region10: #{tpu_custom_call.1} parent=5 // pred_check_branch
        %174 = sbr.rel (%p171) target = $region12
      $region11: #{tpu_custom_call.1} parent=5 // pred_region
        %s175 = ssub.s32 %s20, 1
        // Predicated region
        $region13: #{tpu_custom_call.1} parent=11 // pred_check
          %p176 = pneg %p93
        $region14: #{tpu_custom_call.1} parent=11 // pred_check_branch
          %178 = sbr.rel (%p176) target = $region16
        $region15: #{tpu_custom_call.1} parent=11 // pred_region
          _
        $region16: #{tpu_custom_call.1} parent=11 // pred_fallthru
          _
        // Predicated region
        $region17: #{tpu_custom_call.1} parent=11 // pred_check
          %p179 = pneg %p114
        $region18: #{tpu_custom_call.1} parent=11 // pred_check_branch
          %181 = sbr.rel (%p179) target = $region20
        $region19: #{tpu_custom_call.1} parent=11 // pred_region
          _
        $region20: #{tpu_custom_call.1} parent=11 // pred_fallthru
          _
        // Predicated region
        $region21: #{tpu_custom_call.1} parent=11 // pred_check
          %p182 = pneg %p135
        $region22: #{tpu_custom_call.1} parent=11 // pred_check_branch
          %184 = sbr.rel (%p182) target = $region24
        $region23: #{tpu_custom_call.1} parent=11 // pred_region
          _
        $region24: #{tpu_custom_call.1} parent=11 // pred_fallthru
          _
      $region12: #{tpu_custom_call.1} parent=5 // pred_fallthru
        _
      %p185 = scmp.lt.s32.totalorder %s20, 4
      // Predicated region
      $region25: #{tpu_custom_call.1} parent=5 // pred_check
        %p186 = pneg %p185
      $region26: #{tpu_custom_call.1} parent=5 // pred_check_branch
        %188 = sbr.rel (%p186) target = $region28
      $region27: #{tpu_custom_call.1} parent=5 // pred_region
        // Predicated region
        $region29: #{tpu_custom_call.1} parent=27 // pred_check
          %p189 = pneg %p40
        $region30: #{tpu_custom_call.1} parent=27 // pred_check_branch
          %191 = sbr.rel (%p189) target = $region32
        $region31: #{tpu_custom_call.1} parent=27 // pred_region
          %s192 = sand.u32 %s30, 1
          %s193 = scalar_lea.sflag [#allocation3], %s192
          %s194 = sand.u32 %s30, 1
          %s195 = smul.addr %s194, 32
          %s196 = scalar_lea.vmem [#allocation2], %s195
          %s197 = smul.u32 2, %s20
          %s199 = ssub.s32 512, 512
          %200 = vsyncadd %s193, %s199
          %s201 = smul.addr %s197, 64
          %s202 = scalar_lea.hbm %s0, %s201
          %s203 = sshll.u32 %s196, 4
          %s204 = int_to_ptr.vmem [resolvable:$true] %s203
          %209 = dma.hbm_to_vmem [thread:$0]  %s202, 512, %s204, %s193, 512, 128, 8
        $region32: #{tpu_custom_call.1} parent=27 // pred_fallthru
          _
        // Predicated region
        $region33: #{tpu_custom_call.1} parent=27 // pred_check
          %p210 = pneg %p66
        $region34: #{tpu_custom_call.1} parent=27 // pred_check_branch
          %212 = sbr.rel (%p210) target = $region36
        $region35: #{tpu_custom_call.1} parent=27 // pred_region
          %s213 = sand.u32 %s56, 1
          %s214 = scalar_lea.sflag [#allocation6], %s213
          %s215 = sand.u32 %s56, 1
          %s216 = smul.addr %s215, 16
          %s217 = scalar_lea.vmem [#allocation5], %s216
          %s218 = smul.u32 2, %s20
          %s220 = ssub.s32 256, 256
          %221 = vsyncadd %s214, %s220
          %s222 = smul.addr %s218, 64
          %s223 = scalar_lea.hbm %s1, %s222
          %s224 = sshll.u32 %s217, 4
          %s225 = int_to_ptr.vmem [resolvable:$true] %s224
          %230 = dma.hbm_to_vmem [thread:$0]  %s223, 256, %s225, %s214, 512, 128, 8
        $region36: #{tpu_custom_call.1} parent=27 // pred_fallthru
          _
      $region28: #{tpu_custom_call.1} parent=5 // pred_fallthru
        _
      %p231 = scmp.le.s32.totalorder 1, %s20
      %p232 = scmp.lt.s32.totalorder %s20, 5
      %p233 = pnand %p231, %p232
      %p234 = pneg %p233
      // Predicated region
      $region37: #{tpu_custom_call.1} parent=5 // pred_check
        _
      $region38: #{tpu_custom_call.1} parent=5 // pred_check_branch
        %236 = sbr.rel (%p233) target = $region40
      $region39: #{tpu_custom_call.1} parent=5 // pred_region
        %s237 = ssub.s32 %s20, 1
        %s238 = sand.u32 %s33, 1
        %s239 = scalar_lea.sflag [#allocation3], %s238
        %s240 = sand.u32 %s33, 1
        %s241 = smul.addr %s240, 32
        %s242 = scalar_lea.vmem [#allocation2], %s241
        // Predicated region
        $region41: #{tpu_custom_call.1} parent=39 // pred_check
          %p243 = pneg %p46
        $region42: #{tpu_custom_call.1} parent=39 // pred_check_branch
          %245 = sbr.rel (%p243) target = $region44
        $region43: #{tpu_custom_call.1} parent=39 // pred_region
          %246 = dma.done %s239, 512
        $region44: #{tpu_custom_call.1} parent=39 // pred_fallthru
          _
        %s247 = sand.u32 %s59, 1
        %s248 = scalar_lea.sflag [#allocation6], %s247
        %s249 = sand.u32 %s59, 1
        %s250 = smul.addr %s249, 16
        %s251 = scalar_lea.vmem [#allocation5], %s250
        // Predicated region
        $region45: #{tpu_custom_call.1} parent=39 // pred_check
          %p252 = pneg %p72
        $region46: #{tpu_custom_call.1} parent=39 // pred_check_branch
          %254 = sbr.rel (%p252) target = $region48
        $region47: #{tpu_custom_call.1} parent=39 // pred_region
          %255 = dma.done %s248, 256
        $region48: #{tpu_custom_call.1} parent=39 // pred_fallthru
          _
        %s256 = sand.u32 %s33, 1
        %s257 = scalar_lea.sflag [#allocation3], %s256
        %s258 = sand.u32 %s33, 1
        %s259 = smul.addr %s258, 32
        %s260 = scalar_lea.vmem [#allocation2], %s259
        %p261 = pneg %p46
        %p262 = pneg %p43
        %s263 = sand.u32 %s59, 1
        %s264 = scalar_lea.sflag [#allocation6], %s263
        %s265 = sand.u32 %s59, 1
        %s266 = smul.addr %s265, 16
        %s267 = scalar_lea.vmem [#allocation5], %s266
        %p268 = pneg %p72
        %p269 = pneg %p69
        %p270 = pneg %p93
        %p271 = pneg %p90
        %p272 = pneg %p114
        %p273 = pneg %p111
        %p274 = pneg %p135
        %p275 = pneg %p132
        %p276 = pneg %p161
        %p277 = pneg %p158
        %s278 = sand.u32 %s148, 1
        %s279 = scalar_lea.sflag [#allocation4], %s278
        %s280 = sand.u32 %s148, 1
        %s281 = smul.addr %s280, 32
        %s282 = scalar_lea.vmem [#allocation7], %s281
        %s283 = smul.u32 2, %s25
        %s284 = smul.u32 2, %s25
        %s285 = smul.u32 2, %s25
        %v287 = vld [vmem:[%s242] sm:$0xff]
        %v288 = vld [vmem:[%s242 + $0x8] sm:$0xff]
        %v289 = vld [vmem:[%s242 + $0x10] sm:$0xff]
        %v290 = vld [vmem:[%s242 + $0x18] sm:$0xff]
        %v291 = vld [vmem:[%s2] sm:$0xf]
        %v292 = vld [vmem:[%s2 + $0x4] sm:$0xf]
        %v293 = vld [vmem:[%s2 + $0x8] sm:$0xf]
        %v294 = vld [vmem:[%s2 + $0xc] sm:$0xf]
        %v295 = vld [vmem:[%s3] sm:$0xf]
        %v296 = vld [vmem:[%s3 + $0x4] sm:$0xf]
        %v297 = vld [vmem:[%s3 + $0x8] sm:$0xf]
        %v298 = vld [vmem:[%s3 + $0xc] sm:$0xf]
        %v299 = vld [vmem:[%s251] sm:$0xff]
        %v300 = vld [vmem:[%s251 + $0x8] sm:$0xff]
        %v305 = vunpack.c.l.b16 %v295
        %v306 = vunpack.c.l.b16 %v296
        %v307 = vunpack.c.l.b16 %v297
        %v308 = vunpack.c.l.b16 %v298
        %v309 = vpack.c.b16 %v306, %v305
        %v310 = vpack.c.b16 %v308, %v307
        %v313 = vunpack.c.l.b16 %v299
        %v314 = vunpack.c.h.b16 %v299
        %v315 = vunpack.c.l.b16 %v300
        %v316 = vunpack.c.h.b16 %v300
        %v317 = vpack.c.b16 %v315, %v313
        %v318 = vpack.c.b16 %v316, %v314
        %vm321 = vcmask 130048
        %v323 = vsel %vm321, %v309, 0
        %v326 = vsel %vm321, %v310, 0
        %328 = vmatprep.subr.bf16.mxu0 %v318
        %329 = vmatpush1.bf16.msra.mxu0 %v317
        %330 = vmatprep.subr.bf16.mxu0 0
        %331 = vmatpush1.bf16.msra.mxu0 0
        %332 = vmatprep.subr.bf16.mxu0 0
        %333 = vmatpush1.bf16.msra.mxu0 0
        %334 = vmatprep.subr.bf16.mxu0 0
        %335 = vmatpush1.bf16.msra.mxu0 0
        %336 = vmatprep.subr.bf16.mxu0 0
        %337 = vmatpush1.bf16.msra.mxu0 0
        %338 = vmatprep.subr.bf16.mxu0 0
        %339 = vmatpush1.bf16.msra.mxu0 0
        %340 = vmatprep.subr.bf16.mxu0 0
        %341 = vmatpush1.bf16.msra.mxu0 0
        %342 = vmatprep.subr.bf16.mxu0 0
        %343 = vmatpush1.bf16.msra.mxu0 0
        %344 = vmatprep.subr.bf16.mxu0 0
        %345 = vmatpush1.bf16.msra.mxu0 0
        %346 = vmatprep.subr.bf16.mxu0 0
        %347 = vmatpush1.bf16.msra.mxu0 0
        %348 = vmatprep.subr.bf16.mxu0 0
        %349 = vmatpush1.bf16.msra.mxu0 0
        %350 = vmatprep.subr.bf16.mxu0 0
        %351 = vmatpush1.bf16.msra.mxu0 0
        %352 = vmatprep.subr.bf16.mxu0 0
        %353 = vmatpush1.bf16.msra.mxu0 0
        %354 = vmatprep.subr.bf16.mxu0 0
        %355 = vmatpush1.bf16.msra.mxu0 0
        %356 = vmatprep.subr.bf16.mxu0 0
        %357 = vmatpush1.bf16.msra.mxu0 0
        %358 = vmatprep.subr.bf16.mxu0 0
        %359 = vmatpush1.bf16.msra.mxu0 0
        %360 = vmatprep.mubr.bf16.mxu0 0
        %361 = vmatmul.mubr.bf16.gmra.mrb[0].mxu0 %v323
        %v362 = vpop.f32.mrb[0].mxu0
        %v363 = vadd.f32 0.0, %v362
        %v364 = vpop.f32.mrb[0].mxu0
        %v365 = vadd.f32 0.0, %v364
        %v366 = vpop.f32.mrb[0].mxu0
        %v367 = vadd.f32 0.0, %v366
        %v368 = vpop.f32.mrb[0].mxu0
        %v369 = vadd.f32 0.0, %v368
        %370 = vmatprep.mubr.bf16.mxu0 0
        %371 = vmatmul.mubr.bf16.gmra.mrb[0].mxu0 %v326
        %v372 = vpop.f32.mrb[0].mxu0
        %v373 = vadd.f32 0.0, %v372
        %v374 = vpop.f32.mrb[0].mxu0
        %v375 = vadd.f32 0.0, %v374
        %v376 = vpop.f32.mrb[0].mxu0
        %v377 = vadd.f32 0.0, %v376
        %v378 = vpop.f32.mrb[0].mxu0
        %v379 = vadd.f32 0.0, %v378
        %380 = vdwg.mxu0
        %v385 = vunpack.c.l.b16 %v291
        %v386 = vunpack.c.l.b16 %v292
        %v387 = vunpack.c.l.b16 %v293
        %v388 = vunpack.c.l.b16 %v294
        %v389 = vpack.c.b16 %v386, %v385
        %v390 = vpack.c.b16 %v388, %v387
        %v395 = vunpack.c.l.b16 %v287
        %v396 = vunpack.c.h.b16 %v287
        %v397 = vunpack.c.l.b16 %v288
        %v398 = vunpack.c.h.b16 %v288
        %v399 = vunpack.c.l.b16 %v289
        %v400 = vunpack.c.h.b16 %v289
        %v401 = vunpack.c.l.b16 %v290
        %v402 = vunpack.c.h.b16 %v290
        %v403 = vpack.c.b16 %v397, %v395
        %v404 = vpack.c.b16 %v398, %v396
        %v405 = vpack.c.b16 %v401, %v399
        %v406 = vpack.c.b16 %v402, %v400
        %vm411 = vcmask 261120
        %v413 = vsel %vm411, %v389, 0
        %v416 = vsel %vm411, %v390, 0
        %418 = vmatprep.subr.bf16.mxu0 %v404
        %419 = vmatpush1.bf16.msra.mxu0 %v403
        %420 = vmatprep.subr.bf16.mxu0 %v406
        %421 = vmatpush1.bf16.msra.mxu0 %v405
        %422 = vmatprep.subr.bf16.mxu0 0
        %423 = vmatpush1.bf16.msra.mxu0 0
        %424 = vmatprep.subr.bf16.mxu0 0
        %425 = vmatpush1.bf16.msra.mxu0 0
        %426 = vmatprep.subr.bf16.mxu0 0
        %427 = vmatpush1.bf16.msra.mxu0 0
        %428 = vmatprep.subr.bf16.mxu0 0
        %429 = vmatpush1.bf16.msra.mxu0 0
        %430 = vmatprep.subr.bf16.mxu0 0
        %431 = vmatpush1.bf16.msra.mxu0 0
        %432 = vmatprep.subr.bf16.mxu0 0
        %433 = vmatpush1.bf16.msra.mxu0 0
        %434 = vmatprep.subr.bf16.mxu0 0
        %435 = vmatpush1.bf16.msra.mxu0 0
        %436 = vmatprep.subr.bf16.mxu0 0
        %437 = vmatpush1.bf16.msra.mxu0 0
        %438 = vmatprep.subr.bf16.mxu0 0
        %439 = vmatpush1.bf16.msra.mxu0 0
        %440 = vmatprep.subr.bf16.mxu0 0
        %441 = vmatpush1.bf16.msra.mxu0 0
        %442 = vmatprep.subr.bf16.mxu0 0
        %443 = vmatpush1.bf16.msra.mxu0 0
        %444 = vmatprep.subr.bf16.mxu0 0
        %445 = vmatpush1.bf16.msra.mxu0 0
        %446 = vmatprep.subr.bf16.mxu0 0
        %447 = vmatpush1.bf16.msra.mxu0 0
        %448 = vmatprep.subr.bf16.mxu0 0
        %449 = vmatpush1.bf16.msra.mxu0 0
        %450 = vmatprep.mubr.bf16.mxu0 0
        %451 = vmatmul.mubr.bf16.gmra.mrb[0].mxu0 %v413
        %v452 = vpop.f32.mrb[0].mxu0
        %v453 = vadd.f32 %v363, %v452
        %v454 = vpop.f32.mrb[0].mxu0
        %v455 = vadd.f32 %v365, %v454
        %v456 = vpop.f32.mrb[0].mxu0
        %v457 = vadd.f32 %v367, %v456
        %v458 = vpop.f32.mrb[0].mxu0
        %v459 = vadd.f32 %v369, %v458
        %460 = vmatprep.mubr.bf16.mxu0 0
        %461 = vmatmul.mubr.bf16.gmra.mrb[0].mxu0 %v416
        %v462 = vpop.f32.mrb[0].mxu0
        %v463 = vadd.f32 %v373, %v462
        %v464 = vpop.f32.mrb[0].mxu0
        %v465 = vadd.f32 %v375, %v464
        %v466 = vpop.f32.mrb[0].mxu0
        %v467 = vadd.f32 %v377, %v466
        %v468 = vpop.f32.mrb[0].mxu0
        %v469 = vadd.f32 %v379, %v468
        %470 = vdwg.mxu0
        %v471 = vld [vmem:[%s4] sm:$0xff]
        %v472 = vld [vmem:[%s4 + $0x8] sm:$0xff]
        %v473 = vld [vmem:[%s4 + $0x10] sm:$0xff]
        %v474 = vld [vmem:[%s4 + $0x18] sm:$0xff]
        %476 = vset.pattern.permute.xlu0 0
        %477 = vperm.xlu0 %476, %v471
        %v478 = vpop.permute.xlu0 %477
        %481 = vset.pattern.permute.xlu0 0
        %482 = vperm.xlu0 %481, %v472
        %v483 = vpop.permute.xlu0 %482
        %486 = vset.pattern.permute.xlu0 0
        %487 = vperm.xlu0 %486, %v473
        %v488 = vpop.permute.xlu0 %487
        %491 = vset.pattern.permute.xlu0 0
        %492 = vperm.xlu0 %491, %v474
        %v493 = vpop.permute.xlu0 %492
        %v495 = vadd.f32 %v453, %v478
        %v496 = vadd.f32 %v455, %v478
        %v497 = vadd.f32 %v457, %v483
        %v498 = vadd.f32 %v459, %v483
        %v499 = vadd.f32 %v463, %v488
        %v500 = vadd.f32 %v465, %v488
        %v501 = vadd.f32 %v467, %v493
        %v502 = vadd.f32 %v469, %v493
        %v503 = vmax.f32 %v495, %v499
        %v504 = vmax.f32 %v497, %v501
        %v505 = vmax.f32 %v503, %v504
        %v506 = vrot.slane %v505, 4
        %v507 = vmax.f32 %v505, %v506
        %v508 = vrot.slane %v507, 2
        %v509 = vmax.f32 %v507, %v508
        %v510 = vrot.slane %v509, 1
        %v511 = vmax.f32 %v509, %v510
        %v512 = vmax.f32 %v496, %v500
        %v513 = vmax.f32 %v498, %v502
        %v514 = vmax.f32 %v512, %v513
        %v515 = vrot.slane %v514, 4
        %v516 = vmax.f32 %v514, %v515
        %v517 = vrot.slane %v516, 2
        %v518 = vmax.f32 %v516, %v517
        %v519 = vrot.slane %v518, 1
        %v520 = vmax.f32 %v518, %v519
        %v521 = vsub.f32 %v495, %v511
        %v522 = vsub.f32 %v496, %v520
        %v523 = vsub.f32 %v497, %v511
        %v524 = vsub.f32 %v498, %v520
        %v525 = vsub.f32 %v499, %v511
        %v526 = vsub.f32 %v500, %v520
        %v527 = vsub.f32 %v501, %v511
        %v528 = vsub.f32 %v502, %v520
        %v529 = vmul.f32 %v521, 1.442695
        %v530 = vpow.pop %v529
        %v531 = vmul.f32 %v522, 1.442695
        %v532 = vpow.pop %v531
        %v533 = vmul.f32 %v523, 1.442695
        %v534 = vpow.pop %v533
        %v535 = vmul.f32 %v524, 1.442695
        %v536 = vpow.pop %v535
        %v537 = vmul.f32 %v525, 1.442695
        %v538 = vpow.pop %v537
        %v539 = vmul.f32 %v526, 1.442695
        %v540 = vpow.pop %v539
        %v541 = vmul.f32 %v527, 1.442695
        %v542 = vpow.pop %v541
        %v543 = vmul.f32 %v528, 1.442695
        %v544 = vpow.pop %v543
        %v545 = vadd.f32 %v530, %v534
        %v546 = vadd.f32 %v545, %v538
        %v547 = vadd.f32 %v546, %v542
        %v548 = vrot.slane %v547, 4
        %v549 = vadd.f32 %v547, %v548
        %v550 = vrot.slane %v549, 2
        %v551 = vadd.f32 %v549, %v550
        %v552 = vrot.slane %v551, 1
        %v553 = vadd.f32 %v551, %v552
        %v554 = vadd.f32 %v532, %v536
        %v555 = vadd.f32 %v554, %v540
        %v556 = vadd.f32 %v555, %v544
        %v557 = vrot.slane %v556, 4
        %v558 = vadd.f32 %v556, %v557
        %v559 = vrot.slane %v558, 2
        %v560 = vadd.f32 %v558, %v559
        %v561 = vrot.slane %v560, 1
        %v562 = vadd.f32 %v560, %v561
        %v563 = vrcp.pop %v553
        %v564 = vmul.f32 %v530, %v563
        %v565 = vrcp.pop %v562
        %v566 = vmul.f32 %v532, %v565
        %v567 = vmul.f32 %v534, %v563
        %v568 = vmul.f32 %v536, %v565
        %v569 = vmul.f32 %v538, %v563
        %v570 = vmul.f32 %v540, %v565
        %v571 = vmul.f32 %v542, %v563
        %v572 = vmul.f32 %v544, %v565
        %v573 = vsub.f32 1.0, %v564
        %v574 = vsub.f32 1.0, %v566
        %v575 = vsub.f32 1.0, %v567
        %v576 = vsub.f32 1.0, %v568
        %v577 = vsub.f32 1.0, %v569
        %v578 = vsub.f32 1.0, %v570
        %v579 = vsub.f32 1.0, %v571
        %v580 = vsub.f32 1.0, %v572
        %v581 = vunpack.c.l.bf16 %v287
        %v582 = vunpack.c.h.bf16 %v287
        %v583 = vunpack.c.l.bf16 %v288
        %v584 = vunpack.c.h.bf16 %v288
        %v585 = vunpack.c.l.bf16 %v289
        %v586 = vunpack.c.h.bf16 %v289
        %v587 = vunpack.c.l.bf16 %v290
        %v588 = vunpack.c.h.bf16 %v290
        %v589 = vmul.f32 %v573, %v581
        %v590 = vmul.f32 %v574, %v582
        %v591 = vmul.f32 %v575, %v583
        %v592 = vmul.f32 %v576, %v584
        %v593 = vmul.f32 %v577, %v585
        %v594 = vmul.f32 %v578, %v586
        %v595 = vmul.f32 %v579, %v587
        %v596 = vmul.f32 %v580, %v588
        %v597 = vadd.f32 %v564, %v589
        %v598 = vadd.f32 %v566, %v590
        %v599 = vadd.f32 %v567, %v591
        %v600 = vadd.f32 %v568, %v592
        %v601 = vadd.f32 %v569, %v593
        %v602 = vadd.f32 %v570, %v594
        %v603 = vadd.f32 %v571, %v595
        %v604 = vadd.f32 %v572, %v596
        %v605 = vpack.c.bf16 %v599, %v597
        %v606 = vpack.c.bf16 %v600, %v598
        %v607 = vpack.c.bf16 %v603, %v601
        %v608 = vpack.c.bf16 %v604, %v602
        %v613 = vunpack.c.l.b16 %v605
        %v614 = vunpack.c.l.b16 %v606
        %v615 = vunpack.c.h.b16 %v605
        %v616 = vunpack.c.h.b16 %v606
        %v617 = vunpack.c.l.b16 %v607
        %v618 = vunpack.c.l.b16 %v608
        %v619 = vunpack.c.h.b16 %v607
        %v620 = vunpack.c.h.b16 %v608
        %v621 = vpack.c.b16 %v614, %v613
        %v622 = vpack.c.b16 %v616, %v615
        %v623 = vpack.c.b16 %v618, %v617
        %v624 = vpack.c.b16 %v620, %v619
        %629 = vst [vmem:[%s282] sm:$0xff] %v621
        %630 = vst [vmem:[%s282 + $0x8] sm:$0xff] %v622
        %631 = vst [vmem:[%s282 + $0x10] sm:$0xff] %v623
        %632 = vst [vmem:[%s282 + $0x18] sm:$0xff] %v624
        %s633 = sand.u32 %s148, 1
        %s634 = scalar_lea.sflag [#allocation4], %s633
        %s635 = sand.u32 %s148, 1
        %s636 = smul.addr %s635, 32
        %s637 = scalar_lea.vmem [#allocation7], %s636
        // Predicated region
        $region49: #{tpu_custom_call.1} parent=39 // pred_check
          %p638 = pneg %p158
        $region50: #{tpu_custom_call.1} parent=39 // pred_check_branch
          %640 = sbr.rel (%p638) target = $region52
        $region51: #{tpu_custom_call.1} parent=39 // pred_region
          %s641 = smul.u32 2, %s25
          %s643 = ssub.s32 512, 512
          %644 = vsyncadd %s634, %s643
          %s645 = smul.addr %s641, 64
          %s646 = scalar_lea.hbm %s5, %s645
          %s647 = sshll.u32 %s637, 4
          %s648 = int_to_ptr.vmem [resolvable:$true] %s647
          %653 = dma.vmem_to_hbm [thread:$0]  %s648, 512, %s646, %s634, 128, 512, 8
        $region52: #{tpu_custom_call.1} parent=39 // pred_fallthru
          _
      $region40: #{tpu_custom_call.1} parent=5 // pred_fallthru
        _
      %p654 = scmp.le.s32.totalorder 2, %s20
      // Predicated region
      $region53: #{tpu_custom_call.1} parent=5 // pred_check
        %p655 = pneg %p654
      $region54: #{tpu_custom_call.1} parent=5 // pred_check_branch
        %657 = sbr.rel (%p655) target = $region56
      $region55: #{tpu_custom_call.1} parent=5 // pred_region
        %s658 = ssub.s32 %s20, 2
        // Predicated region
        $region57: #{tpu_custom_call.1} parent=55 // pred_check
          %p659 = pneg %p164
        $region58: #{tpu_custom_call.1} parent=55 // pred_check_branch
          %661 = sbr.rel (%p659) target = $region60
        $region59: #{tpu_custom_call.1} parent=55 // pred_region
          %s662 = sand.u32 %s149, 1
          %s663 = scalar_lea.sflag [#allocation4], %s662
          %s664 = sand.u32 %s149, 1
          %s665 = smul.addr %s664, 32
          %s666 = scalar_lea.vmem [#allocation7], %s665
          %667 = dma.done %s663, 512
        $region60: #{tpu_custom_call.1} parent=55 // pred_fallthru
          _
      $region56: #{tpu_custom_call.1} parent=5 // pred_fallthru
        _
    $region6: #{tpu_custom_call.1} parent=1 // loop_footer
      %s24 = sadd.s32 1, %s20
    $region7: #{tpu_custom_call.1} parent=1 // loop_footer_branch
      %19 = sbr.rel target = $region3
    $region8: #{tpu_custom_call.1} parent=1 // loop_exit
      _
    %668 = vsyncpa [#allocation3], 1
    %s669 = scalar_lea.sflag [#allocation3], 1
    %670 = vsyncpa %s669, 1
    %671 = vsyncpa [#allocation6], 1
    %s672 = scalar_lea.sflag [#allocation6], 1
    %673 = vsyncpa %s672, 1
    %674 = vsyncpa [#allocation4], 1
    %s675 = scalar_lea.sflag [#allocation4], 1
    %676 = vsyncpa %s675, 1

</llo_original>
